<compile_context>
chip_gen: v7x
topology: tpu7x:2x2x1
jax: 0.10.0
libtpu: 0.0.40
codegen_flags: <defaults>
</compile_context>

<pallas_src>
import math

import numpy as np
import jax
import jax.numpy as jnp
from jax.experimental import pallas as pl
from jax.experimental.pallas import tpu as pltpu


# ----------------------------------------------------------------------------
# Bicubic interpolation matrices (host-side, tiny).
# ----------------------------------------------------------------------------
def _cubic(x, A=-0.75):
    x = abs(x)
    if x <= 1.0:
        return (A + 2.0) * x ** 3 - (A + 3.0) * x ** 2 + 1.0
    if x < 2.0:
        return A * x ** 3 - 5.0 * A * x ** 2 + 8.0 * A * x - 4.0 * A
    return 0.0


def _bicubic_matrix(in_size, out_size):
    """Dense (out_size, in_size) bicubic interpolation matrix (A=-0.75,
    half-pixel coordinate mapping, edge-replicated taps) — matches torch
    bicubic interpolation with align_corners=False, antialias=False."""
    # TODO(synk): torchvision >= 0.17 defaults to antialias=True for tensor
    # inputs; the classic (non-antialiased) bicubic kernel is implemented here.
    scale = in_size / out_size
    R = np.zeros((out_size, in_size), dtype=np.float64)
    for i in range(out_size):
        src = (i + 0.5) * scale - 0.5
        f = math.floor(src)
        t = src - f
        w = (_cubic(t + 1.0), _cubic(t), _cubic(1.0 - t), _cubic(2.0 - t))
        for k in range(4):
            idx = min(max(f - 1 + k, 0), in_size - 1)
            R[i, idx] += w[k]
    return R.astype(np.float32)


def _resize_geometry(H, W, S):
    # Resize([S]): match the SHORTER edge to S, preserve aspect ratio.
    if H <= W:
        new_h, new_w = S, int(S * W / H)
    else:
        new_h, new_w = int(S * H / W), S
    # CenterCrop(S) offsets (resized image is always >= S on both edges here).
    top = int(round((new_h - S) / 2.0))
    left = int(round((new_w - S) / 2.0))
    return new_h, new_w, top, left


# ----------------------------------------------------------------------------
# Kernels.
# ----------------------------------------------------------------------------
def _make_kernel_h_first(P, S):
    """Contract H first (used when H >= W): per-plane (S,H)@(H,W) into a
    (P*S, W) bf16 scratch, then one flattened (P*S, W)@(W, S) matmul."""

    def kernel(rh_ref, rwt_ref, x_ref, o_ref, t_ref):
        rh = rh_ref[...]                                               # (S, H) bf16
        for p in range(P):                                             # static unroll
            xp = x_ref[p].astype(jnp.float32).astype(jnp.bfloat16)     # (H, W) u8 -> bf16
            tp = jnp.dot(rh, xp, preferred_element_type=jnp.float32)   # (S, W) f32
            t_ref[p * S:(p + 1) * S, :] = tp.astype(jnp.bfloat16)
        y = jnp.dot(t_ref[...], rwt_ref[...],
                    preferred_element_type=jnp.float32)                # (P*S, S) f32
        # torchvision bicubic on uint8 rounds & clamps back to [0, 255];
        # ConvertImageDtype(torch.float) then divides by 255.  (f32 epilogue.)
        y = jnp.clip(jnp.round(y), 0.0, 255.0) * (1.0 / 255.0)
        o_ref[...] = y.reshape(P, S, S)

    return kernel


def _make_kernel_w_first(P, S):
    """Contract W first (used when W > H, the landscape case): per-plane
    (H,W)@(W,S) then (S,H)@(H,S); no scratch needed."""

    def kernel(rh_ref, rwt_ref, x_ref, o_ref):
        rh = rh_ref[...]                                               # (S, H) bf16
        rwt = rwt_ref[...]                                             # (W, S) bf16
        for p in range(P):                                             # static unroll
            xp = x_ref[p].astype(jnp.float32).astype(jnp.bfloat16)     # (H, W)
            zp = jnp.dot(xp, rwt, preferred_element_type=jnp.float32)  # (H, S) f32
            yp = jnp.dot(rh, zp.astype(jnp.bfloat16),
                         preferred_element_type=jnp.float32)           # (S, S) f32
            o_ref[p] = jnp.clip(jnp.round(yp), 0.0, 255.0) * (1.0 / 255.0)

    return kernel


# ----------------------------------------------------------------------------
# Sizing helpers.
# ----------------------------------------------------------------------------
def _vmem_capacity_bytes():
    try:
        info = pltpu.get_tpu_info()
        cap = getattr(info, "vmem_capacity_bytes", None)
        if cap:
            return int(cap)
    except Exception:
        pass
    return 64 << 20  # conservative default (v7x per-core VMEM)


def _pick_plane_batch(n_planes, H, W, S, budget_bytes, max_unroll=32):
    """Pick P = planes per grid step: fits the VMEM budget, divides n_planes
    (no partial blocks), keeps the grid >= 2 steps (v7x has 2 TensorCores)."""
    # Per-plane VMEM footprint: double-buffered u8 input, double-buffered f32
    # output, bf16 intermediate + epilogue temporaries (conservative).
    per_plane = 4 * H * W + 16 * S * S + 2 * S * max(H, W)
    p_cap = max(1, min(max_unroll, int(budget_bytes // per_plane)))
    if n_planes >= 2:
        p_cap = min(p_cap, n_planes // 2)
    p_cap = max(1, p_cap)
    for p in range(p_cap, 0, -1):
        if n_planes % p == 0:
            return p
    return 1


# ----------------------------------------------------------------------------
# Public entry point (equivalent to Transform.forward).
# ----------------------------------------------------------------------------
def transform(x_u8, image_size):
    """x_u8: uint8 array of shape (N, C, H, W). Returns float32 (N, C, S, S)."""
    N, C, H, W = x_u8.shape
    S = image_size
    n_planes = N * C
    new_h, new_w, top, left = _resize_geometry(H, W, S)

    # Fold the center crop into the interpolation matrices; bf16 operands
    # (f32 accumulation happens on the MXU inside the kernel).
    rh = jnp.asarray(_bicubic_matrix(H, new_h)[top:top + S],
                     dtype=jnp.bfloat16)                               # (S, H)
    rwt = jnp.asarray(_bicubic_matrix(W, new_w)[left:left + S].T,
                      dtype=jnp.bfloat16)                              # (W, S)

    # Keep the input as uint8; the cast happens on-chip inside the kernel.
    x = x_u8.reshape(n_planes, H, W)

    cap = _vmem_capacity_bytes()
    vmem_limit = int(min(cap * 3 // 4, 100 << 20))
    budget = max(8 << 20, vmem_limit - (8 << 20))
    P = _pick_plane_batch(n_planes, H, W, S, budget)
    grid = (n_planes // P,)

    contract_h_first = H >= W  # contract the longer original edge first
    if contract_h_first:
        kernel = _make_kernel_h_first(P, S)
        scratch_shapes = [pltpu.VMEM((P * S, W), jnp.bfloat16)]
        flops = 2 * n_planes * (S * H * W + S * S * W)
    else:
        kernel = _make_kernel_w_first(P, S)
        scratch_shapes = []
        flops = 2 * n_planes * (H * W * S + S * S * H)

    cost = pl.CostEstimate(
        flops=flops,
        transcendentals=0,
        bytes_accessed=n_planes * (H * W + 4 * S * S) + 2 * (S * H + W * S))

    out = pl.pallas_call(
        kernel,
        out_shape=jax.ShapeDtypeStruct((n_planes, S, S), jnp.float32),
        grid_spec=pltpu.PrefetchScalarGridSpec(
            num_scalar_prefetch=0,
            grid=grid,
            in_specs=[
                pl.BlockSpec((S, H), lambda g: (0, 0)),        # Rh   (whole array)
                pl.BlockSpec((W, S), lambda g: (0, 0)),        # Rw^T (whole array)
                pl.BlockSpec((P, H, W), lambda g: (g, 0, 0)),  # P uint8 planes/step
            ],
            out_specs=pl.BlockSpec((P, S, S), lambda g: (g, 0, 0)),
            scratch_shapes=scratch_shapes),
        compiler_params=pltpu.CompilerParams(
            dimension_semantics=("parallel",),
            vmem_limit_bytes=vmem_limit),
        cost_estimate=cost,
    )(rh, rwt, x)
    return out.reshape(N, C, S, S)


# ----------------------------------------------------------------------------
# Pure-JAX float32 reference (same math, no Pallas / no bf16).
# ----------------------------------------------------------------------------
def _reference_f32(x_u8, image_size):
    N, C, H, W = x_u8.shape
    S = image_size
    new_h, new_w, top, left = _resize_geometry(H, W, S)
    Rh = jnp.asarray(_bicubic_matrix(H, new_h)[top:top + S])
    Rw = jnp.asarray(_bicubic_matrix(W, new_w)[left:left + S])
    xf = x_u8.astype(jnp.float32)
    y = jnp.einsum("oh,nchw,pw->ncop", Rh, xf, Rw)
    return jnp.clip(jnp.round(y), 0.0, 255.0) / 255.0


if __name__ == "__main__":
    key = jax.random.PRNGKey(0)
    image_size = 16
    k1, k2 = jax.random.split(key)
    # Landscape (W > H): exercises the contract-W-first kernel.
    x1 = jax.random.randint(k1, (2, 3, 20, 28), 0, 256, dtype=jnp.int32)
    x1 = x1.astype(jnp.uint8)
    # Portrait (H > W): exercises the contract-H-first kernel (flattened 2nd matmul).
    x2 = jax.random.randint(k2, (2, 3, 28, 20), 0, 256, dtype=jnp.int32)
    x2 = x2.astype(jnp.uint8)

    for x in (x1, x2):
        y = jax.block_until_ready(transform(x, image_size))
        assert y.shape == (2, 3, image_size, image_size), y.shape
        assert y.dtype == jnp.float32, y.dtype

        y_ref = jax.block_until_ready(_reference_f32(x, image_size))
        max_err = float(jnp.max(jnp.abs(y - y_ref)))
        mean_err = float(jnp.mean(jnp.abs(y - y_ref)))
        # bf16 interpolation weights (f32 accumulation) -> a few /255 worst case.
        assert max_err <= 0.03, max_err
        assert mean_err <= 0.008, mean_err

    print("KERNEL_OK")
</pallas_src>

<mosaic_0001>
module attributes {stable_mosaic.version = 11 : i64} {
  func.func @kernel(%arg0: i32, %arg1: memref<16x20xbf16, #tpu.memory_space<vmem>>, %arg2: memref<28x16xbf16, #tpu.memory_space<vmem>>, %arg3: memref<3x20x28xi8, #tpu.memory_space<vmem>>, %arg4: memref<3x16x16xf32, #tpu.memory_space<vmem>>) attributes {dimension_semantics = [#tpu.dimension_semantics<parallel>], iteration_bounds = array<i64: 2>, scalar_prefetch = 0 : i64, scratch_operands = 0 : i64, tpu.core_type = #tpu.core_type<tc>, window_params = [{pipeline_mode = #tpu.pipeline_mode<synchronous>, transform_indices = @transform_0, window_bounds = array<i64: 16, 20>}, {pipeline_mode = #tpu.pipeline_mode<synchronous>, transform_indices = @transform_1, window_bounds = array<i64: 28, 16>}, {transform_indices = @transform_2, window_bounds = array<i64: 3, 20, 28>}, {transform_indices = @transform_3, window_bounds = array<i64: 3, 16, 16>}]} {
    %c0 = arith.constant 0 : index
    %c0_0 = arith.constant 0 : index
    %0 = vector.load %arg1[%c0, %c0_0] : memref<16x20xbf16, #tpu.memory_space<vmem>>, vector<16x20xbf16>
    %c0_1 = arith.constant 0 : index
    %c0_2 = arith.constant 0 : index
    %1 = vector.load %arg2[%c0_1, %c0_2] : memref<28x16xbf16, #tpu.memory_space<vmem>>, vector<28x16xbf16>
    %c0_3 = arith.constant 0 : index
    %c0_4 = arith.constant 0 : index
    %c0_5 = arith.constant 0 : index
    %2 = vector.load %arg3[%c0_3, %c0_4, %c0_5] : memref<3x20x28xi8, #tpu.memory_space<vmem>>, vector<1x20x28xi8>
    %3 = vector.shape_cast %2 : vector<1x20x28xi8> to vector<20x28xi8>
    %4 = arith.uitofp %3 : vector<20x28xi8> to vector<20x28xf32>
    %5 = arith.truncf %4 : vector<20x28xf32> to vector<20x28xbf16>
    %cst = arith.constant dense<0.000000e+00> : vector<20x16xf32>
    %6 = tpu.matmul %5, %1, %cst {dimension_numbers = #tpu.dot_dimension_numbers<[1], [0], [0], [1], [0, 0, 1, 1], [], []>} : vector<20x28xbf16>, vector<28x16xbf16>, vector<20x16xf32> -> vector<20x16xf32>
    %7 = arith.truncf %6 : vector<20x16xf32> to vector<20x16xbf16>
    %cst_6 = arith.constant dense<0.000000e+00> : vector<16x16xf32>
    %8 = tpu.matmul %0, %7, %cst_6 {dimension_numbers = #tpu.dot_dimension_numbers<[1], [0], [0], [1], [0, 0, 1, 1], [], []>} : vector<16x20xbf16>, vector<20x16xbf16>, vector<16x16xf32> -> vector<16x16xf32>
    %9 = math.roundeven %8 : vector<16x16xf32>
    %cst_7 = arith.constant 0.000000e+00 : f32
    %cst_8 = arith.constant 2.550000e+02 : f32
    %10 = vector.broadcast %cst_7 : f32 to vector<16x16xf32>
    %11 = arith.maximumf %10, %9 : vector<16x16xf32>
    %12 = vector.broadcast %cst_8 : f32 to vector<16x16xf32>
    %13 = arith.minimumf %12, %11 : vector<16x16xf32>
    %cst_9 = arith.constant 0.00392156886 : f32
    %14 = vector.broadcast %cst_9 : f32 to vector<16x16xf32>
    %15 = arith.mulf %13, %14 : vector<16x16xf32>
    %c0_10 = arith.constant 0 : index
    %c0_11 = arith.constant 0 : index
    %c0_12 = arith.constant 0 : index
    %16 = vector.load %arg4[%c0_10, %c0_11, %c0_12] : memref<3x16x16xf32, #tpu.memory_space<vmem>>, vector<1x16x16xf32>
    %17 = vector.shape_cast %16 : vector<1x16x16xf32> to vector<16x16xf32>
    %18 = vector.shape_cast %15 : vector<16x16xf32> to vector<1x16x16xf32>
    tpu.vector_store %arg4[%c0_10, %c0_11, %c0_12], %18 {strides = array<i32>} : memref<3x16x16xf32, #tpu.memory_space<vmem>>, vector<1x16x16xf32>,
    %c1 = arith.constant 1 : index
    %c0_13 = arith.constant 0 : index
    %c0_14 = arith.constant 0 : index
    %19 = vector.load %arg3[%c1, %c0_13, %c0_14] : memref<3x20x28xi8, #tpu.memory_space<vmem>>, vector<1x20x28xi8>
    %20 = vector.shape_cast %19 : vector<1x20x28xi8> to vector<20x28xi8>
    %21 = arith.uitofp %20 : vector<20x28xi8> to vector<20x28xf32>
    %22 = arith.truncf %21 : vector<20x28xf32> to vector<20x28xbf16>
    %cst_15 = arith.constant dense<0.000000e+00> : vector<20x16xf32>
    %23 = tpu.matmul %22, %1, %cst_15 {dimension_numbers = #tpu.dot_dimension_numbers<[1], [0], [0], [1], [0, 0, 1, 1], [], []>} : vector<20x28xbf16>, vector<28x16xbf16>, vector<20x16xf32> -> vector<20x16xf32>
    %24 = arith.truncf %23 : vector<20x16xf32> to vector<20x16xbf16>
    %cst_16 = arith.constant dense<0.000000e+00> : vector<16x16xf32>
    %25 = tpu.matmul %0, %24, %cst_16 {dimension_numbers = #tpu.dot_dimension_numbers<[1], [0], [0], [1], [0, 0, 1, 1], [], []>} : vector<16x20xbf16>, vector<20x16xbf16>, vector<16x16xf32> -> vector<16x16xf32>
    %26 = math.roundeven %25 : vector<16x16xf32>
    %cst_17 = arith.constant 0.000000e+00 : f32
    %cst_18 = arith.constant 2.550000e+02 : f32
    %27 = vector.broadcast %cst_17 : f32 to vector<16x16xf32>
    %28 = arith.maximumf %27, %26 : vector<16x16xf32>
    %29 = vector.broadcast %cst_18 : f32 to vector<16x16xf32>
    %30 = arith.minimumf %29, %28 : vector<16x16xf32>
    %cst_19 = arith.constant 0.00392156886 : f32
    %31 = vector.broadcast %cst_19 : f32 to vector<16x16xf32>
    %32 = arith.mulf %30, %31 : vector<16x16xf32>
    %c1_20 = arith.constant 1 : index
    %c0_21 = arith.constant 0 : index
    %c0_22 = arith.constant 0 : index
    %33 = vector.load %arg4[%c1_20, %c0_21, %c0_22] : memref<3x16x16xf32, #tpu.memory_space<vmem>>, vector<1x16x16xf32>
    %34 = vector.shape_cast %33 : vector<1x16x16xf32> to vector<16x16xf32>
    %35 = vector.shape_cast %32 : vector<16x16xf32> to vector<1x16x16xf32>
    tpu.vector_store %arg4[%c1_20, %c0_21, %c0_22], %35 {strides = array<i32>} : memref<3x16x16xf32, #tpu.memory_space<vmem>>, vector<1x16x16xf32>,
    %c2 = arith.constant 2 : index
    %c0_23 = arith.constant 0 : index
    %c0_24 = arith.constant 0 : index
    %36 = vector.load %arg3[%c2, %c0_23, %c0_24] : memref<3x20x28xi8, #tpu.memory_space<vmem>>, vector<1x20x28xi8>
    %37 = vector.shape_cast %36 : vector<1x20x28xi8> to vector<20x28xi8>
    %38 = arith.uitofp %37 : vector<20x28xi8> to vector<20x28xf32>
    %39 = arith.truncf %38 : vector<20x28xf32> to vector<20x28xbf16>
    %cst_25 = arith.constant dense<0.000000e+00> : vector<20x16xf32>
    %40 = tpu.matmul %39, %1, %cst_25 {dimension_numbers = #tpu.dot_dimension_numbers<[1], [0], [0], [1], [0, 0, 1, 1], [], []>} : vector<20x28xbf16>, vector<28x16xbf16>, vector<20x16xf32> -> vector<20x16xf32>
    %41 = arith.truncf %40 : vector<20x16xf32> to vector<20x16xbf16>
    %cst_26 = arith.constant dense<0.000000e+00> : vector<16x16xf32>
    %42 = tpu.matmul %0, %41, %cst_26 {dimension_numbers = #tpu.dot_dimension_numbers<[1], [0], [0], [1], [0, 0, 1, 1], [], []>} : vector<16x20xbf16>, vector<20x16xbf16>, vector<16x16xf32> -> vector<16x16xf32>
    %43 = math.roundeven %42 : vector<16x16xf32>
    %cst_27 = arith.constant 0.000000e+00 : f32
    %cst_28 = arith.constant 2.550000e+02 : f32
    %44 = vector.broadcast %cst_27 : f32 to vector<16x16xf32>
    %45 = arith.maximumf %44, %43 : vector<16x16xf32>
    %46 = vector.broadcast %cst_28 : f32 to vector<16x16xf32>
    %47 = arith.minimumf %46, %45 : vector<16x16xf32>
    %cst_29 = arith.constant 0.00392156886 : f32
    %48 = vector.broadcast %cst_29 : f32 to vector<16x16xf32>
    %49 = arith.mulf %47, %48 : vector<16x16xf32>
    %c2_30 = arith.constant 2 : index
    %c0_31 = arith.constant 0 : index
    %c0_32 = arith.constant 0 : index
    %50 = vector.load %arg4[%c2_30, %c0_31, %c0_32] : memref<3x16x16xf32, #tpu.memory_space<vmem>>, vector<1x16x16xf32>
    %51 = vector.shape_cast %50 : vector<1x16x16xf32> to vector<16x16xf32>
    %52 = vector.shape_cast %49 : vector<16x16xf32> to vector<1x16x16xf32>
    tpu.vector_store %arg4[%c2_30, %c0_31, %c0_32], %52 {strides = array<i32>} : memref<3x16x16xf32, #tpu.memory_space<vmem>>, vector<1x16x16xf32>,
    return
  }
  func.func @transform_0(%arg0: i32) -> (i32, i32) {
    %c0_i32 = arith.constant 0 : i32
    %c0_i32_0 = arith.constant 0 : i32
    %c0_i32_1 = arith.constant 0 : i32
    return %c0_i32, %c0_i32_0 : i32, i32
  }
  func.func @transform_1(%arg0: i32) -> (i32, i32) {
    %c0_i32 = arith.constant 0 : i32
    %c0_i32_0 = arith.constant 0 : i32
    %c0_i32_1 = arith.constant 0 : i32
    return %c0_i32, %c0_i32_0 : i32, i32
  }
  func.func @transform_2(%arg0: i32) -> (i32, i32, i32) {
    %c0_i32 = arith.constant 0 : i32
    %c0_i32_0 = arith.constant 0 : i32
    %c0_i32_1 = arith.constant 0 : i32
    return %arg0, %c0_i32, %c0_i32_0 : i32, i32, i32
  }
  func.func @transform_3(%arg0: i32) -> (i32, i32, i32) {
    %c0_i32 = arith.constant 0 : i32
    %c0_i32_0 = arith.constant 0 : i32
    %c0_i32_1 = arith.constant 0 : i32
    return %arg0, %c0_i32, %c0_i32_0 : i32, i32, i32
  }
}

</mosaic_0001>

<llo_original>
// kernel: tpu_custom_call.1
$region0: #{tpu_custom_call.1}
  #allocation0 [shape = 'u32[]', space=smem, size = 0x4, offset = 0x4, fixed_abs, tag = 'smem constant byte address 0x4 - core index']
  #allocation1 [shape = 'u32[144,128]{1,0:T(1,128)}', space=vmem, size = 0x12000, scoped, tag = 'internal scratch']
  %s0 = inlined_call_operand.vmem [shape: bf16[16,20], index: 0, kind: input, shape index: {}]
  %s1 = inlined_call_operand.vmem [shape: bf16[28,16], index: 1, kind: input, shape index: {}]
  %s2 = inlined_call_operand.hbm [shape: u8[6,20,28], index: 2, kind: input, shape index: {}]
  %s3 = inlined_call_operand.hbm [shape: f32[6,16,16], index: 3, kind: output, shape index: {}]
  %s4 = sld [smem:[#allocation0]]
  $region49: #{tpu_custom_call.1} parent=0
    _
  %s6 = ssub.s32 1, %s4
  %s7 = scalar_select 0, %s6, %s4
  $region1: #{tpu_custom_call.1} parent=0
    #allocation2 [shape = 'u8[18432]{0}', space=vmem, size = 0x4800, scoped, tag = 'input window, operand 2']
    #allocation3 [shape = 's32[2]{0}', space=sflag, size = 0x8, scoped, tag = 'scoped memory for tpu_custom_call.1']
    #allocation4 [shape = 's32[2]{0}', space=sflag, size = 0x8, scoped, tag = 'scoped memory for tpu_custom_call.1']
    #allocation5 [shape = 'u8[49152]{0}', space=vmem, size = 0xc000, scoped, tag = 'output window, operand 0']
    %8 = vsyncpa [#allocation3], 0
    %s9 = scalar_lea.sflag [#allocation3], 1
    %10 = vsyncpa %s9, 0
    %11 = vsyncpa [#allocation4], 0
    %s12 = scalar_lea.sflag [#allocation4], 1
    %13 = vsyncpa %s12, 0
    loop: start=0, step=1, limit=4
    $region2: #{tpu_custom_call.1} parent=1 // loop_pre_header
      _
    $region3: #{tpu_custom_call.1} parent=1 // loop_header
      %s15 = sphi 0, %s19
      %p16 = scmp.ge.s32.totalorder %s15, 4
      %s23 = sphi 0, %s23
      %s25 = sphi 0, %s23
      %s26 = sphi 0, %s25
      %s40 = sphi 0, %s26
      %s44 = sphi 0, %s44
      %s46 = sphi 0, %s44
      %s47 = sphi 0, %s46
      %s61 = sphi 0, %s47
      %s67 = sphi 0, %s69
      %s70 = sphi 0, %s67
      %s71 = sphi 0, %s70
      %s87 = sphi 0, %s71
      %s93 = sphi 0, %s95
      %s96 = sphi 0, %s93
      %s97 = sphi 0, %s96
      %s113 = sphi 0, %s97
    $region4: #{tpu_custom_call.1} parent=1 // loop_header_branch
      %18 = sbr.rel (%p16) target = $region8
    $region5: #{tpu_custom_call.1} parent=1 // loop_body
      %s20 = ssub.s32 %s15, 1
      %s21 = ssub.s32 %s15, 2
      %s22 = sadd.s32 %s15, 1
      %s24 = sadd.s32 %s23, 1
      %p27 = scmp.eq.s32.totalorder %s15, 1
      %p28 = scmp.ne.s32.totalorder %s23, %s25
      %p29 = scmp.eq.s32.totalorder %s15, 0
      %p30 = por %p28, %p29
      %p31 = scmp.ne.s32.totalorder %s23, %s25
      %p32 = scmp.eq.s32.totalorder %s20, 1
      %p33 = por %p31, %p32
      %p34 = scmp.ne.s32.totalorder %s25, %s26
      %p35 = scmp.eq.s32.totalorder %s20, 0
      %p36 = por %p34, %p35
      %p37 = scmp.ne.s32.totalorder %s25, %s26
      %p38 = scmp.eq.s32.totalorder %s21, 1
      %p39 = por %p37, %p38
      %p41 = scmp.ne.s32.totalorder %s26, %s40
      %p42 = scmp.eq.s32.totalorder %s21, 0
      %p43 = por %p41, %p42
      %s45 = sadd.s32 %s44, 1
      %p48 = scmp.eq.s32.totalorder %s15, 1
      %p49 = scmp.ne.s32.totalorder %s44, %s46
      %p50 = scmp.eq.s32.totalorder %s15, 0
      %p51 = por %p49, %p50
      %p52 = scmp.ne.s32.totalorder %s44, %s46
      %p53 = scmp.eq.s32.totalorder %s20, 1
      %p54 = por %p52, %p53
      %p55 = scmp.ne.s32.totalorder %s46, %s47
      %p56 = scmp.eq.s32.totalorder %s20, 0
      %p57 = por %p55, %p56
      %p58 = scmp.ne.s32.totalorder %s46, %s47
      %p59 = scmp.eq.s32.totalorder %s21, 1
      %p60 = por %p58, %p59
      %p62 = scmp.ne.s32.totalorder %s47, %s61
      %p63 = scmp.eq.s32.totalorder %s21, 0
      %p64 = por %p62, %p63
      %s65 = ssub.s32 %s15, %s22
      %p66 = scmp.eq.s32.totalorder %s65, 0
      %s68 = sadd.s32 %s67, 1
      %s69 = scalar_select %p66, %s67, %s68
      %p72 = pneg %p66
      %p73 = scmp.eq.s32.totalorder %s15, 1
      %p74 = por %p72, %p73
      %p75 = scmp.ne.s32.totalorder %s67, %s70
      %p76 = scmp.eq.s32.totalorder %s15, 0
      %p77 = por %p75, %p76
      %p78 = scmp.ne.s32.totalorder %s67, %s70
      %p79 = scmp.eq.s32.totalorder %s20, 1
      %p80 = por %p78, %p79
      %p81 = scmp.ne.s32.totalorder %s70, %s71
      %p82 = scmp.eq.s32.totalorder %s20, 0
      %p83 = por %p81, %p82
      %p84 = scmp.ne.s32.totalorder %s70, %s71
      %p85 = scmp.eq.s32.totalorder %s21, 1
      %p86 = por %p84, %p85
      %p88 = scmp.ne.s32.totalorder %s71, %s87
      %p89 = scmp.eq.s32.totalorder %s21, 0
      %p90 = por %p88, %p89
      %s91 = ssub.s32 %s15, %s22
      %p92 = scmp.eq.s32.totalorder %s91, 0
      %s94 = sadd.s32 %s93, 1
      %s95 = scalar_select %p92, %s93, %s94
      %p98 = pneg %p92
      %p99 = scmp.eq.s32.totalorder %s15, 1
      %p100 = por %p98, %p99
      %p101 = scmp.ne.s32.totalorder %s93, %s96
      %p102 = scmp.eq.s32.totalorder %s15, 0
      %p103 = por %p101, %p102
      %p104 = scmp.ne.s32.totalorder %s93, %s96
      %p105 = scmp.eq.s32.totalorder %s20, 1
      %p106 = por %p104, %p105
      %p107 = scmp.ne.s32.totalorder %s96, %s97
      %p108 = scmp.eq.s32.totalorder %s20, 0
      %p109 = por %p107, %p108
      %p110 = scmp.ne.s32.totalorder %s96, %s97
      %p111 = scmp.eq.s32.totalorder %s21, 1
      %p112 = por %p110, %p111
      %p114 = scmp.ne.s32.totalorder %s97, %s113
      %p115 = scmp.eq.s32.totalorder %s21, 0
      %p116 = por %p114, %p115
      %p117 = scmp.le.s32.totalorder 1, %s15
      %p118 = scmp.lt.s32.totalorder %s15, 3
      %p119 = pnand %p117, %p118
      %p120 = pneg %p119
      // Predicated region
      $region9: #{tpu_custom_call.1} parent=5 // pred_check
        _
      $region10: #{tpu_custom_call.1} parent=5 // pred_check_branch
        %122 = sbr.rel (%p119) target = $region12
      $region11: #{tpu_custom_call.1} parent=5 // pred_region
        %s123 = ssub.s32 %s15, 1
        // Predicated region
        $region13: #{tpu_custom_call.1} parent=11 // pred_check
          %p124 = pneg %p36
        $region14: #{tpu_custom_call.1} parent=11 // pred_check_branch
          %126 = sbr.rel (%p124) target = $region16
        $region15: #{tpu_custom_call.1} parent=11 // pred_region
          _
        $region16: #{tpu_custom_call.1} parent=11 // pred_fallthru
          _
        // Predicated region
        $region17: #{tpu_custom_call.1} parent=11 // pred_check
          %p127 = pneg %p57
        $region18: #{tpu_custom_call.1} parent=11 // pred_check_branch
          %129 = sbr.rel (%p127) target = $region20
        $region19: #{tpu_custom_call.1} parent=11 // pred_region
          _
        $region20: #{tpu_custom_call.1} parent=11 // pred_fallthru
          _
      $region12: #{tpu_custom_call.1} parent=5 // pred_fallthru
        _
      %p130 = scmp.lt.s32.totalorder %s15, 2
      // Predicated region
      $region21: #{tpu_custom_call.1} parent=5 // pred_check
        %p131 = pneg %p130
      $region22: #{tpu_custom_call.1} parent=5 // pred_check_branch
        %133 = sbr.rel (%p131) target = $region24
      $region23: #{tpu_custom_call.1} parent=5 // pred_region
        // Predicated region
        $region25: #{tpu_custom_call.1} parent=23 // pred_check
          %p134 = pneg %p77
        $region26: #{tpu_custom_call.1} parent=23 // pred_check_branch
          %136 = sbr.rel (%p134) target = $region28
        $region27: #{tpu_custom_call.1} parent=23 // pred_region
          %s137 = sand.u32 %s67, 1
          %s138 = scalar_lea.sflag [#allocation3], %s137
          %s139 = sand.u32 %s67, 1
          %s140 = smul.addr %s139, 18
          %s141 = scalar_lea.vmem [#allocation2], %s140
          %s142 = smul.u32 3, %s15
          %s144 = ssub.s32 288, 288
          %145 = vsyncadd %s138, %s144
          %s146 = smul.addr %s142, 3
          %s147 = smul.addr %s146, 32
          %s148 = scalar_lea.hbm %s2, %s147
          %s149 = sshll.u32 %s141, 4
          %s150 = int_to_ptr.vmem [resolvable:$true] %s149
          %155 = dma.hbm_to_vmem [thread:$0]  %s148, 288, %s150, %s138, 32, 32, 2
        $region28: #{tpu_custom_call.1} parent=23 // pred_fallthru
          _
      $region24: #{tpu_custom_call.1} parent=5 // pred_fallthru
        _
      %p156 = scmp.le.s32.totalorder 1, %s15
      %p157 = scmp.lt.s32.totalorder %s15, 3
      %p158 = pnand %p156, %p157
      %p159 = pneg %p158
      // Predicated region
      $region29: #{tpu_custom_call.1} parent=5 // pred_check
        _
      $region30: #{tpu_custom_call.1} parent=5 // pred_check_branch
        %161 = sbr.rel (%p158) target = $region32
      $region31: #{tpu_custom_call.1} parent=5 // pred_region
        %s162 = ssub.s32 %s15, 1
        %s163 = sand.u32 %s70, 1
        %s164 = scalar_lea.sflag [#allocation3], %s163
        %s165 = sand.u32 %s70, 1
        %s166 = smul.addr %s165, 18
        %s167 = scalar_lea.vmem [#allocation2], %s166
        // Predicated region
        $region33: #{tpu_custom_call.1} parent=31 // pred_check
          %p168 = pneg %p83
        $region34: #{tpu_custom_call.1} parent=31 // pred_check_branch
          %170 = sbr.rel (%p168) target = $region36
        $region35: #{tpu_custom_call.1} parent=31 // pred_region
          %171 = dma.done %s164, 288
        $region36: #{tpu_custom_call.1} parent=31 // pred_fallthru
          _
        %p172 = pneg %p36
        %p173 = pneg %p33
        %p174 = pneg %p57
        %p175 = pneg %p54
        %s176 = sand.u32 %s70, 1
        %s177 = scalar_lea.sflag [#allocation3], %s176
        %s178 = sand.u32 %s70, 1
        %s179 = smul.addr %s178, 18
        %s180 = scalar_lea.vmem [#allocation2], %s179
        %p181 = pneg %p83
        %p182 = pneg %p80
        %p183 = pneg %p109
        %p184 = pneg %p106
        %s185 = sand.u32 %s96, 1
        %s186 = scalar_lea.sflag [#allocation4], %s185
        %s187 = sand.u32 %s96, 1
        %s188 = smul.addr %s187, 48
        %s189 = scalar_lea.vmem [#allocation5], %s188
        %s190 = smul.u32 3, %s20
        %s191 = smul.u32 3, %s20
        %v193 = vld [vmem:[%s0] sm:$0xf]
        %v194 = vld [vmem:[%s0 + $0x4] sm:$0xf]
        %v195 = vld [vmem:[%s1] sm:$0xf]
        %v196 = vld [vmem:[%s1 + $0x4] sm:$0xf]
        %v197 = vld [vmem:[%s1 + $0x8] sm:$0xf]
        %v198 = vld [vmem:[%s1 + $0xc] sm:$0x3]
        %v199 = vld [vmem:[%s167] sm:$0x3]
        %v200 = vld [vmem:[%s167 + $0x2] sm:$0x3]
        %v201 = vld [vmem:[%s167 + $0x4] sm:$0x1]
        %v202 = vunpack.c.l.u8.bf16 %v199
        %v203 = vunpack.c.l.u8.bf16 %v200
        %v204 = vunpack.c.l.u8.bf16 %v201
        %v208 = vunpack.c.l.b16 %v202
        %v209 = vunpack.c.l.b16 %v203
        %v210 = vunpack.c.l.b16 %v204
        %v211 = vpack.c.b16 %v209, %v208
        %v212 = vpack.c.b16 %v210, %v210
        %v217 = vunpack.c.l.b16 %v195
        %v218 = vunpack.c.l.b16 %v196
        %v219 = vunpack.c.l.b16 %v197
        %v220 = vunpack.c.l.b16 %v198
        %v221 = vpack.c.b16 %v218, %v217
        %v222 = vpack.c.b16 %v220, %v219
        %vm224 = vcmask 228352
        %v226 = vsel %vm224, %v211, 0
        %v229 = vsel %vm224, %v212, 0
        %vm231 = vcmask 1045504
        %v233 = vsel %vm231, %v222, 0
        %235 = vmatprep.subr.bf16.mxu0 0
        %236 = vmatpush1.bf16.msra.mxu0 %v221
        %237 = vmatprep.subr.bf16.mxu0 0
        %238 = vmatpush1.bf16.msra.mxu0 %v233
        %239 = vmatprep.subr.bf16.mxu0 0
        %240 = vmatpush1.bf16.msra.mxu0 0
        %241 = vmatprep.subr.bf16.mxu0 0
        %242 = vmatpush1.bf16.msra.mxu0 0
        %243 = vmatprep.subr.bf16.mxu0 0
        %244 = vmatpush1.bf16.msra.mxu0 0
        %245 = vmatprep.subr.bf16.mxu0 0
        %246 = vmatpush1.bf16.msra.mxu0 0
        %247 = vmatprep.subr.bf16.mxu0 0
        %248 = vmatpush1.bf16.msra.mxu0 0
        %249 = vmatprep.subr.bf16.mxu0 0
        %250 = vmatpush1.bf16.msra.mxu0 0
        %251 = vmatprep.subr.bf16.mxu0 0
        %252 = vmatpush1.bf16.msra.mxu0 0
        %253 = vmatprep.subr.bf16.mxu0 0
        %254 = vmatpush1.bf16.msra.mxu0 0
        %255 = vmatprep.subr.bf16.mxu0 0
        %256 = vmatpush1.bf16.msra.mxu0 0
        %257 = vmatprep.subr.bf16.mxu0 0
        %258 = vmatpush1.bf16.msra.mxu0 0
        %259 = vmatprep.subr.bf16.mxu0 0
        %260 = vmatpush1.bf16.msra.mxu0 0
        %261 = vmatprep.subr.bf16.mxu0 0
        %262 = vmatpush1.bf16.msra.mxu0 0
        %263 = vmatprep.subr.bf16.mxu0 0
        %264 = vmatpush1.bf16.msra.mxu0 0
        %265 = vmatprep.subr.bf16.mxu0 0
        %266 = vmatpush1.bf16.msra.mxu0 0
        %267 = vmatprep.mubr.bf16.mxu0 0
        %268 = vmatmul.mubr.bf16.gmra.mrb[0].mxu0 %v226
        %v269 = vpop.f32.mrb[0].mxu0
        %v270 = vadd.f32 0.0, %v269
        %v271 = vpop.f32.mrb[0].mxu0
        %v272 = vpop.f32.mrb[0].mxu0
        %v273 = vadd.f32 0.0, %v272
        %v274 = vpop.f32.mrb[0].mxu0
        %275 = vmatprep.mubr.bf16.mxu0 0
        %276 = vmatmul.mubr.bf16.gmra.mrb[0].mxu0 %v229
        %v277 = vpop.f32.mrb[0].mxu0
        %v278 = vadd.f32 0.0, %v277
        %v279 = vpop.f32.mrb[0].mxu0
        %v280 = vpop.f32.mrb[0].mxu0
        %v281 = vpop.f32.mrb[0].mxu0
        %282 = vdwg.mxu0
        %v283 = vpack.c.bf16 %v273, %v270
        %v284 = vpack.c.bf16 %v278, %v278
        %v287 = vunpack.c.l.b16 %v193
        %v288 = vunpack.c.l.b16 %v194
        %v289 = vpack.c.b16 %v288, %v287
        %vm290 = vcmask 162816
        %v292 = vsel %vm290, %v289, 0
        %vm294 = vcmask 1041408
        %v296 = vsel %vm294, %v284, 0
        %298 = vmatprep.subr.bf16.mxu0 0
        %299 = vmatpush1.bf16.msra.mxu0 %v283
        %300 = vmatprep.subr.bf16.mxu0 0
        %301 = vmatpush1.bf16.msra.mxu0 %v296
        %302 = vmatprep.subr.bf16.mxu0 0
        %303 = vmatpush1.bf16.msra.mxu0 0
        %304 = vmatprep.subr.bf16.mxu0 0
        %305 = vmatpush1.bf16.msra.mxu0 0
        %306 = vmatprep.subr.bf16.mxu0 0
        %307 = vmatpush1.bf16.msra.mxu0 0
        %308 = vmatprep.subr.bf16.mxu0 0
        %309 = vmatpush1.bf16.msra.mxu0 0
        %310 = vmatprep.subr.bf16.mxu0 0
        %311 = vmatpush1.bf16.msra.mxu0 0
        %312 = vmatprep.subr.bf16.mxu0 0
        %313 = vmatpush1.bf16.msra.mxu0 0
        %314 = vmatprep.subr.bf16.mxu0 0
        %315 = vmatpush1.bf16.msra.mxu0 0
        %316 = vmatprep.subr.bf16.mxu0 0
        %317 = vmatpush1.bf16.msra.mxu0 0
        %318 = vmatprep.subr.bf16.mxu0 0
        %319 = vmatpush1.bf16.msra.mxu0 0
        %320 = vmatprep.subr.bf16.mxu0 0
        %321 = vmatpush1.bf16.msra.mxu0 0
        %322 = vmatprep.subr.bf16.mxu0 0
        %323 = vmatpush1.bf16.msra.mxu0 0
        %324 = vmatprep.subr.bf16.mxu0 0
        %325 = vmatpush1.bf16.msra.mxu0 0
        %326 = vmatprep.subr.bf16.mxu0 0
        %327 = vmatpush1.bf16.msra.mxu0 0
        %328 = vmatprep.subr.bf16.mxu0 0
        %329 = vmatpush1.bf16.msra.mxu0 0
        %330 = vmatprep.mubr.bf16.mxu0 0
        %331 = vmatmul.mubr.bf16.gmra.mrb[0].mxu0 %v292
        %v332 = vpop.f32.mrb[0].mxu0
        %v333 = vadd.f32 0.0, %v332
        %v334 = vpop.f32.mrb[0].mxu0
        %v335 = vpop.f32.mrb[0].mxu0
        %v336 = vadd.f32 0.0, %v335
        %v337 = vpop.f32.mrb[0].mxu0
        %338 = vdwg.mxu0
        %v339 = vround.ne.pseudo %v333
        %v340 = vround.ne.pseudo %v336
        %v341 = vmax.f32 %v339, 0.0
        %v342 = vmax.f32 %v340, 0.0
        %v343 = vmin.f32 %v341, 255.0
        %v344 = vmin.f32 %v342, 255.0
        %v345 = vmul.f32 %v343, 0.003921569
        %v346 = vmul.f32 %v344, 0.003921569
        %vm347 = vcmask 130048
        %348 = vst.msk [vmem:[%s189] sm:$0xff] %vm347, %v345
        %349 = vst.msk [vmem:[%s189 + $0x8] sm:$0xff] %vm347, %v346
        %s350 = scalar_lea.vmem %s167, 6 [#allocation2]
        %v351 = vld [vmem:[%s350] sm:$0x3]
        %v352 = vld [vmem:[%s350 + $0x2] sm:$0x3]
        %v353 = vld [vmem:[%s350 + $0x4] sm:$0x1]
        %v354 = vunpack.c.l.u8.bf16 %v351
        %v355 = vunpack.c.l.u8.bf16 %v352
        %v356 = vunpack.c.l.u8.bf16 %v353
        %v360 = vunpack.c.l.b16 %v354
        %v361 = vunpack.c.l.b16 %v355
        %v362 = vunpack.c.l.b16 %v356
        %v363 = vpack.c.b16 %v361, %v360
        %v364 = vpack.c.b16 %v362, %v362
        %v366 = vsel %vm224, %v363, 0
        %v369 = vsel %vm224, %v364, 0
        %371 = vmatprep.subr.bf16.mxu0 0
        %372 = vmatpush1.bf16.msra.mxu0 %v221
        %373 = vmatprep.subr.bf16.mxu0 0
        %374 = vmatpush1.bf16.msra.mxu0 %v233
        %375 = vmatprep.subr.bf16.mxu0 0
        %376 = vmatpush1.bf16.msra.mxu0 0
        %377 = vmatprep.subr.bf16.mxu0 0
        %378 = vmatpush1.bf16.msra.mxu0 0
        %379 = vmatprep.subr.bf16.mxu0 0
        %380 = vmatpush1.bf16.msra.mxu0 0
        %381 = vmatprep.subr.bf16.mxu0 0
        %382 = vmatpush1.bf16.msra.mxu0 0
        %383 = vmatprep.subr.bf16.mxu0 0
        %384 = vmatpush1.bf16.msra.mxu0 0
        %385 = vmatprep.subr.bf16.mxu0 0
        %386 = vmatpush1.bf16.msra.mxu0 0
        %387 = vmatprep.subr.bf16.mxu0 0
        %388 = vmatpush1.bf16.msra.mxu0 0
        %389 = vmatprep.subr.bf16.mxu0 0
        %390 = vmatpush1.bf16.msra.mxu0 0
        %391 = vmatprep.subr.bf16.mxu0 0
        %392 = vmatpush1.bf16.msra.mxu0 0
        %393 = vmatprep.subr.bf16.mxu0 0
        %394 = vmatpush1.bf16.msra.mxu0 0
        %395 = vmatprep.subr.bf16.mxu0 0
        %396 = vmatpush1.bf16.msra.mxu0 0
        %397 = vmatprep.subr.bf16.mxu0 0
        %398 = vmatpush1.bf16.msra.mxu0 0
        %399 = vmatprep.subr.bf16.mxu0 0
        %400 = vmatpush1.bf16.msra.mxu0 0
        %401 = vmatprep.subr.bf16.mxu0 0
        %402 = vmatpush1.bf16.msra.mxu0 0
        %403 = vmatprep.mubr.bf16.mxu0 0
        %404 = vmatmul.mubr.bf16.gmra.mrb[0].mxu0 %v366
        %v405 = vpop.f32.mrb[0].mxu0
        %v406 = vadd.f32 0.0, %v405
        %v407 = vpop.f32.mrb[0].mxu0
        %v408 = vpop.f32.mrb[0].mxu0
        %v409 = vadd.f32 0.0, %v408
        %v410 = vpop.f32.mrb[0].mxu0
        %411 = vmatprep.mubr.bf16.mxu0 0
        %412 = vmatmul.mubr.bf16.gmra.mrb[0].mxu0 %v369
        %v413 = vpop.f32.mrb[0].mxu0
        %v414 = vadd.f32 0.0, %v413
        %v415 = vpop.f32.mrb[0].mxu0
        %v416 = vpop.f32.mrb[0].mxu0
        %v417 = vpop.f32.mrb[0].mxu0
        %418 = vdwg.mxu0
        %v419 = vpack.c.bf16 %v409, %v406
        %v420 = vpack.c.bf16 %v414, %v414
        %v422 = vsel %vm294, %v420, 0
        %424 = vmatprep.subr.bf16.mxu0 0
        %425 = vmatpush1.bf16.msra.mxu0 %v419
        %426 = vmatprep.subr.bf16.mxu0 0
        %427 = vmatpush1.bf16.msra.mxu0 %v422
        %428 = vmatprep.subr.bf16.mxu0 0
        %429 = vmatpush1.bf16.msra.mxu0 0
        %430 = vmatprep.subr.bf16.mxu0 0
        %431 = vmatpush1.bf16.msra.mxu0 0
        %432 = vmatprep.subr.bf16.mxu0 0
        %433 = vmatpush1.bf16.msra.mxu0 0
        %434 = vmatprep.subr.bf16.mxu0 0
        %435 = vmatpush1.bf16.msra.mxu0 0
        %436 = vmatprep.subr.bf16.mxu0 0
        %437 = vmatpush1.bf16.msra.mxu0 0
        %438 = vmatprep.subr.bf16.mxu0 0
        %439 = vmatpush1.bf16.msra.mxu0 0
        %440 = vmatprep.subr.bf16.mxu0 0
        %441 = vmatpush1.bf16.msra.mxu0 0
        %442 = vmatprep.subr.bf16.mxu0 0
        %443 = vmatpush1.bf16.msra.mxu0 0
        %444 = vmatprep.subr.bf16.mxu0 0
        %445 = vmatpush1.bf16.msra.mxu0 0
        %446 = vmatprep.subr.bf16.mxu0 0
        %447 = vmatpush1.bf16.msra.mxu0 0
        %448 = vmatprep.subr.bf16.mxu0 0
        %449 = vmatpush1.bf16.msra.mxu0 0
        %450 = vmatprep.subr.bf16.mxu0 0
        %451 = vmatpush1.bf16.msra.mxu0 0
        %452 = vmatprep.subr.bf16.mxu0 0
        %453 = vmatpush1.bf16.msra.mxu0 0
        %454 = vmatprep.subr.bf16.mxu0 0
        %455 = vmatpush1.bf16.msra.mxu0 0
        %456 = vmatprep.mubr.bf16.mxu0 0
        %457 = vmatmul.mubr.bf16.gmra.mrb[0].mxu0 %v292
        %v458 = vpop.f32.mrb[0].mxu0
        %v459 = vadd.f32 0.0, %v458
        %v460 = vpop.f32.mrb[0].mxu0
        %v461 = vpop.f32.mrb[0].mxu0
        %v462 = vadd.f32 0.0, %v461
        %v463 = vpop.f32.mrb[0].mxu0
        %464 = vdwg.mxu0
        %v465 = vround.ne.pseudo %v459
        %v466 = vround.ne.pseudo %v462
        %v467 = vmax.f32 %v465, 0.0
        %v468 = vmax.f32 %v466, 0.0
        %v469 = vmin.f32 %v467, 255.0
        %v470 = vmin.f32 %v468, 255.0
        %v471 = vmul.f32 %v469, 0.003921569
        %v472 = vmul.f32 %v470, 0.003921569
        %s473 = scalar_lea.vmem %s189, 16 [#allocation5]
        %474 = vst.msk [vmem:[%s473] sm:$0xff] %vm347, %v471
        %475 = vst.msk [vmem:[%s473 + $0x8] sm:$0xff] %vm347, %v472
        %s476 = scalar_lea.vmem %s167, 12 [#allocation2]
        %v477 = vld [vmem:[%s476] sm:$0x3]
        %v478 = vld [vmem:[%s476 + $0x2] sm:$0x3]
        %v479 = vld [vmem:[%s476 + $0x4] sm:$0x1]
        %v480 = vunpack.c.l.u8.bf16 %v477
        %v481 = vunpack.c.l.u8.bf16 %v478
        %v482 = vunpack.c.l.u8.bf16 %v479
        %v486 = vunpack.c.l.b16 %v480
        %v487 = vunpack.c.l.b16 %v481
        %v488 = vunpack.c.l.b16 %v482
        %v489 = vpack.c.b16 %v487, %v486
        %v490 = vpack.c.b16 %v488, %v488
        %v492 = vsel %vm224, %v489, 0
        %v495 = vsel %vm224, %v490, 0
        %497 = vmatprep.subr.bf16.mxu0 0
        %498 = vmatpush1.bf16.msra.mxu0 %v221
        %499 = vmatprep.subr.bf16.mxu0 0
        %500 = vmatpush1.bf16.msra.mxu0 %v233
        %501 = vmatprep.subr.bf16.mxu0 0
        %502 = vmatpush1.bf16.msra.mxu0 0
        %503 = vmatprep.subr.bf16.mxu0 0
        %504 = vmatpush1.bf16.msra.mxu0 0
        %505 = vmatprep.subr.bf16.mxu0 0
        %506 = vmatpush1.bf16.msra.mxu0 0
        %507 = vmatprep.subr.bf16.mxu0 0
        %508 = vmatpush1.bf16.msra.mxu0 0
        %509 = vmatprep.subr.bf16.mxu0 0
        %510 = vmatpush1.bf16.msra.mxu0 0
        %511 = vmatprep.subr.bf16.mxu0 0
        %512 = vmatpush1.bf16.msra.mxu0 0
        %513 = vmatprep.subr.bf16.mxu0 0
        %514 = vmatpush1.bf16.msra.mxu0 0
        %515 = vmatprep.subr.bf16.mxu0 0
        %516 = vmatpush1.bf16.msra.mxu0 0
        %517 = vmatprep.subr.bf16.mxu0 0
        %518 = vmatpush1.bf16.msra.mxu0 0
        %519 = vmatprep.subr.bf16.mxu0 0
        %520 = vmatpush1.bf16.msra.mxu0 0
        %521 = vmatprep.subr.bf16.mxu0 0
        %522 = vmatpush1.bf16.msra.mxu0 0
        %523 = vmatprep.subr.bf16.mxu0 0
        %524 = vmatpush1.bf16.msra.mxu0 0
        %525 = vmatprep.subr.bf16.mxu0 0
        %526 = vmatpush1.bf16.msra.mxu0 0
        %527 = vmatprep.subr.bf16.mxu0 0
        %528 = vmatpush1.bf16.msra.mxu0 0
        %529 = vmatprep.mubr.bf16.mxu0 0
        %530 = vmatmul.mubr.bf16.gmra.mrb[0].mxu0 %v492
        %v531 = vpop.f32.mrb[0].mxu0
        %v532 = vadd.f32 0.0, %v531
        %v533 = vpop.f32.mrb[0].mxu0
        %v534 = vpop.f32.mrb[0].mxu0
        %v535 = vadd.f32 0.0, %v534
        %v536 = vpop.f32.mrb[0].mxu0
        %537 = vmatprep.mubr.bf16.mxu0 0
        %538 = vmatmul.mubr.bf16.gmra.mrb[0].mxu0 %v495
        %v539 = vpop.f32.mrb[0].mxu0
        %v540 = vadd.f32 0.0, %v539
        %v541 = vpop.f32.mrb[0].mxu0
        %v542 = vpop.f32.mrb[0].mxu0
        %v543 = vpop.f32.mrb[0].mxu0
        %544 = vdwg.mxu0
        %v545 = vpack.c.bf16 %v535, %v532
        %v546 = vpack.c.bf16 %v540, %v540
        %v548 = vsel %vm294, %v546, 0
        %550 = vmatprep.subr.bf16.mxu0 0
        %551 = vmatpush1.bf16.msra.mxu0 %v545
        %552 = vmatprep.subr.bf16.mxu0 0
        %553 = vmatpush1.bf16.msra.mxu0 %v548
        %554 = vmatprep.subr.bf16.mxu0 0
        %555 = vmatpush1.bf16.msra.mxu0 0
        %556 = vmatprep.subr.bf16.mxu0 0
        %557 = vmatpush1.bf16.msra.mxu0 0
        %558 = vmatprep.subr.bf16.mxu0 0
        %559 = vmatpush1.bf16.msra.mxu0 0
        %560 = vmatprep.subr.bf16.mxu0 0
        %561 = vmatpush1.bf16.msra.mxu0 0
        %562 = vmatprep.subr.bf16.mxu0 0
        %563 = vmatpush1.bf16.msra.mxu0 0
        %564 = vmatprep.subr.bf16.mxu0 0
        %565 = vmatpush1.bf16.msra.mxu0 0
        %566 = vmatprep.subr.bf16.mxu0 0
        %567 = vmatpush1.bf16.msra.mxu0 0
        %568 = vmatprep.subr.bf16.mxu0 0
        %569 = vmatpush1.bf16.msra.mxu0 0
        %570 = vmatprep.subr.bf16.mxu0 0
        %571 = vmatpush1.bf16.msra.mxu0 0
        %572 = vmatprep.subr.bf16.mxu0 0
        %573 = vmatpush1.bf16.msra.mxu0 0
        %574 = vmatprep.subr.bf16.mxu0 0
        %575 = vmatpush1.bf16.msra.mxu0 0
        %576 = vmatprep.subr.bf16.mxu0 0
        %577 = vmatpush1.bf16.msra.mxu0 0
        %578 = vmatprep.subr.bf16.mxu0 0
        %579 = vmatpush1.bf16.msra.mxu0 0
        %580 = vmatprep.subr.bf16.mxu0 0
        %581 = vmatpush1.bf16.msra.mxu0 0
        %582 = vmatprep.mubr.bf16.mxu0 0
        %583 = vmatmul.mubr.bf16.gmra.mrb[0].mxu0 %v292
        %v584 = vpop.f32.mrb[0].mxu0
        %v585 = vadd.f32 0.0, %v584
        %v586 = vpop.f32.mrb[0].mxu0
        %v587 = vpop.f32.mrb[0].mxu0
        %v588 = vadd.f32 0.0, %v587
        %v589 = vpop.f32.mrb[0].mxu0
        %590 = vdwg.mxu0
        %v591 = vround.ne.pseudo %v585
        %v592 = vround.ne.pseudo %v588
        %v593 = vmax.f32 %v591, 0.0
        %v594 = vmax.f32 %v592, 0.0
        %v595 = vmin.f32 %v593, 255.0
        %v596 = vmin.f32 %v594, 255.0
        %v597 = vmul.f32 %v595, 0.003921569
        %v598 = vmul.f32 %v596, 0.003921569
        %s599 = scalar_lea.vmem %s189, 32 [#allocation5]
        %600 = vst.msk [vmem:[%s599] sm:$0xff] %vm347, %v597
        %601 = vst.msk [vmem:[%s599 + $0x8] sm:$0xff] %vm347, %v598
        %s602 = sand.u32 %s96, 1
        %s603 = scalar_lea.sflag [#allocation4], %s602
        %s604 = sand.u32 %s96, 1
        %s605 = smul.addr %s604, 48
        %s606 = scalar_lea.vmem [#allocation5], %s605
        // Predicated region
        $region37: #{tpu_custom_call.1} parent=31 // pred_check
          %p607 = pneg %p106
        $region38: #{tpu_custom_call.1} parent=31 // pred_check_branch
          %609 = sbr.rel (%p607) target = $region40
        $region39: #{tpu_custom_call.1} parent=31 // pred_region
          %s610 = smul.u32 3, %s20
          %s612 = ssub.s32 768, 768
          %613 = vsyncadd %s603, %s612
          %s614 = smul.addr %s610, 2
          %s615 = smul.addr %s614, 128
          %s616 = scalar_lea.hbm %s3, %s615
          %s617 = sshll.u32 %s606, 4
          %s618 = int_to_ptr.vmem [resolvable:$true] %s617
          %623 = dma.vmem_to_hbm [thread:$0]  %s618, 768, %s616, %s603, 128, 128, 8
        $region40: #{tpu_custom_call.1} parent=31 // pred_fallthru
          _
      $region32: #{tpu_custom_call.1} parent=5 // pred_fallthru
        _
      %p624 = scmp.le.s32.totalorder 2, %s15
      // Predicated region
      $region41: #{tpu_custom_call.1} parent=5 // pred_check
        %p625 = pneg %p624
      $region42: #{tpu_custom_call.1} parent=5 // pred_check_branch
        %627 = sbr.rel (%p625) target = $region44
      $region43: #{tpu_custom_call.1} parent=5 // pred_region
        %s628 = ssub.s32 %s15, 2
        // Predicated region
        $region45: #{tpu_custom_call.1} parent=43 // pred_check
          %p629 = pneg %p112
        $region46: #{tpu_custom_call.1} parent=43 // pred_check_branch
          %631 = sbr.rel (%p629) target = $region48
        $region47: #{tpu_custom_call.1} parent=43 // pred_region
          %s632 = sand.u32 %s97, 1
          %s633 = scalar_lea.sflag [#allocation4], %s632
          %s634 = sand.u32 %s97, 1
          %s635 = smul.addr %s634, 48
          %s636 = scalar_lea.vmem [#allocation5], %s635
          %637 = dma.done %s633, 768
        $region48: #{tpu_custom_call.1} parent=43 // pred_fallthru
          _
      $region44: #{tpu_custom_call.1} parent=5 // pred_fallthru
        _
    $region6: #{tpu_custom_call.1} parent=1 // loop_footer
      %s19 = sadd.s32 1, %s15
    $region7: #{tpu_custom_call.1} parent=1 // loop_footer_branch
      %14 = sbr.rel target = $region3
    $region8: #{tpu_custom_call.1} parent=1 // loop_exit
      _
    %638 = vsyncpa [#allocation3], 1
    %s639 = scalar_lea.sflag [#allocation3], 1
    %640 = vsyncpa %s639, 1
    %641 = vsyncpa [#allocation4], 1
    %s642 = scalar_lea.sflag [#allocation4], 1
    %643 = vsyncpa %s642, 1

</llo_original>
